<compile_context>
chip_gen: v7x
topology: tpu7x:2x2x1
jax: 0.10.0
libtpu: 0.0.40
codegen_flags: <defaults>
</compile_context>

<pallas_src>
import functools
import math

import jax
import jax.numpy as jnp
from jax import lax
from jax.experimental import pallas as pl
from jax.experimental.pallas import tpu as pltpu


# ----------------------------- tiling helper ------------------------------- #

def _pick_n_tile(n, k, elem_bytes=2, budget_bytes=4 << 20):
    """Largest lane-dense (multiple-of-128) output tile whose (k, tile) weight block
    stays within ~budget (keeps double-buffered weight tiles inside the default scoped
    VMEM on v5e/v6e/v7x). Falls back to the full extent for small n."""
    max_tile = max(128, (budget_bytes // max(1, k * elem_bytes)) // 128 * 128)
    if n <= max_tile:
        return n
    t = max_tile
    while t >= 128:
        if n % t == 0:
            return t
        t -= 128
    return n  # fallback: single full block


# ----------------------------- Pallas kernels ------------------------------ #

def _matmul_kernel(a_ref, w_ref, o_ref):
    acc = jnp.dot(a_ref[...].astype(w_ref.dtype), w_ref[...],
                  preferred_element_type=jnp.float32)
    o_ref[...] = acc.astype(o_ref.dtype)


def pallas_matmul(a, w, out_dtype=jnp.bfloat16):
    """(M, K) @ (K, N) -> (M, N). Tiled over N. Used for one-time cross-K/V precompute."""
    # TODO(synk): tile M as well for very long encoder sequences.
    M, K = a.shape
    K2, N = w.shape
    assert K == K2
    tn = _pick_n_tile(N, K)
    return pl.pallas_call(
        _matmul_kernel,
        grid=(N // tn,),
        out_shape=jax.ShapeDtypeStruct((M, N), out_dtype),
        in_specs=[pl.BlockSpec((M, K), lambda j: (0, 0)),
                  pl.BlockSpec((K, tn), lambda j: (0, j))],
        out_specs=pl.BlockSpec((M, tn), lambda j: (0, j)),
        compiler_params=pltpu.CompilerParams(dimension_semantics=("parallel",)),
    )(a, w)


def _rms_matmul_kernel(x_ref, g_ref, w_ref, o_ref, *, eps, relu):
    x = x_ref[...].astype(jnp.float32)
    var = jnp.mean(x * x, axis=-1, keepdims=True)
    xn = (x * lax.rsqrt(var + eps) * g_ref[...]).astype(w_ref.dtype)   # bf16 into MXU
    acc = jnp.dot(xn, w_ref[...], preferred_element_type=jnp.float32)
    if relu:
        acc = jnp.maximum(acc, 0.0)
    o_ref[...] = acc.astype(o_ref.dtype)


def pallas_rms_matmul(x, g, w, *, relu=False, out_dtype=jnp.bfloat16, eps=1e-6):
    """Fused T5-RMSNorm(x) @ w (+relu). x: (B, D) f32, g: (D,) f32, w: (D, N) bf16."""
    B, D = x.shape
    D2, N = w.shape
    assert D == D2
    tn = _pick_n_tile(N, D)
    return pl.pallas_call(
        functools.partial(_rms_matmul_kernel, eps=eps, relu=relu),
        grid=(N // tn,),
        out_shape=jax.ShapeDtypeStruct((B, N), out_dtype),
        in_specs=[pl.BlockSpec((B, D), lambda j: (0, 0)),
                  pl.BlockSpec((1, D), lambda j: (0, 0)),
                  pl.BlockSpec((D, tn), lambda j: (0, j))],
        out_specs=pl.BlockSpec((B, tn), lambda j: (0, j)),
        compiler_params=pltpu.CompilerParams(dimension_semantics=("parallel",)),
    )(x, g.reshape(1, D), w)


def _matmul_residual_kernel(x_ref, w_ref, r_ref, o_ref):
    acc = jnp.dot(x_ref[...], w_ref[...], preferred_element_type=jnp.float32)
    o_ref[...] = acc + r_ref[...]


def pallas_matmul_residual(x, w, res):
    """x @ w + res. x: (B, K) bf16, w: (K, N) bf16, res: (B, N) f32 -> (B, N) f32."""
    B, K = x.shape
    K2, N = w.shape
    assert K == K2
    tn = _pick_n_tile(N, K)
    return pl.pallas_call(
        _matmul_residual_kernel,
        grid=(N // tn,),
        out_shape=jax.ShapeDtypeStruct((B, N), jnp.float32),
        in_specs=[pl.BlockSpec((B, K), lambda j: (0, 0)),
                  pl.BlockSpec((K, tn), lambda j: (0, j)),
                  pl.BlockSpec((B, tn), lambda j: (0, j))],
        out_specs=pl.BlockSpec((B, tn), lambda j: (0, j)),
        compiler_params=pltpu.CompilerParams(dimension_semantics=("parallel",)),
    )(x, w, res)


def _attn_kernel(q_ref, k_ref, v_ref, b_ref, o_ref, *, scale):
    # One batch element per grid step, all heads batched in one block.
    q = q_ref[0]            # (H, 1, dh)  bf16
    k = k_ref[0]            # (H, T, dh)  bf16
    v = v_ref[0]            # (H, T, dh)  bf16
    bias = b_ref[0]         # (H, 1, T)   f32  (rel-pos bias / mask), softmax kept in f32
    s = jnp.einsum('hqd,htd->hqt', q, k,
                   preferred_element_type=jnp.float32) * scale + bias
    m = jnp.max(s, axis=-1, keepdims=True)
    p = jnp.exp(s - m)
    denom = jnp.sum(p, axis=-1, keepdims=True)
    p = p * pl.reciprocal(denom, approx=True)
    ctx = jnp.einsum('hqt,htd->hqd', p.astype(v.dtype), v,
                     preferred_element_type=jnp.float32)
    o_ref[0] = ctx.astype(o_ref.dtype)


def pallas_attention(q, k, v, bias, scale):
    """Single-query attention, heads batched per grid step.
    q: (B,H,dh) bf16, k/v: (B,H,T,dh) bf16, bias: (B,H,T) f32 -> (B, H*dh) bf16."""
    # TODO(synk): for long max_seq_len, bound the self-attention K/V read by `step`
    #             via memory_space=pl.ANY + manual make_async_copy tiles.
    B, H, dh = q.shape
    T = k.shape[2]
    q4 = q.reshape(B, H, 1, dh)
    b4 = bias.reshape(B, H, 1, T)
    out = pl.pallas_call(
        functools.partial(_attn_kernel, scale=scale),
        grid=(B,),
        out_shape=jax.ShapeDtypeStruct((B, H, 1, dh), q.dtype),
        in_specs=[pl.BlockSpec((1, H, 1, dh), lambda i: (i, 0, 0, 0)),
                  pl.BlockSpec((1, H, T, dh), lambda i: (i, 0, 0, 0)),
                  pl.BlockSpec((1, H, T, dh), lambda i: (i, 0, 0, 0)),
                  pl.BlockSpec((1, H, 1, T), lambda i: (i, 0, 0, 0))],
        out_specs=pl.BlockSpec((1, H, 1, dh), lambda i: (i, 0, 0, 0)),
        compiler_params=pltpu.CompilerParams(dimension_semantics=("parallel",)),
    )(q4, k, v, b4)
    return out.reshape(B, H * dh)


def _lmhead_greedy_kernel(mask_ref, x_ref, g_ref, e_ref, ids_ref, lp_ref,
                          m_sc, s_sc, idx_sc, *, eps, logit_scale, end_id, tile_v):
    """Fused: final RMSNorm -> logits tile (against (V, D) embedding, no transpose)
    -> running max / argmax / logsumexp over vocab tiles -> greedy id + log-prob."""
    j = pl.program_id(0)

    @pl.when(j == 0)
    def _init():
        m_sc[...] = jnp.full_like(m_sc, -jnp.inf)
        s_sc[...] = jnp.zeros_like(s_sc)
        idx_sc[...] = jnp.zeros_like(idx_sc)

    x = x_ref[...].astype(jnp.float32)
    var = jnp.mean(x * x, axis=-1, keepdims=True)
    xn = (x * lax.rsqrt(var + eps) * g_ref[...]).astype(e_ref.dtype)
    # (B, D) @ (tile_v, D)^T -> (B, tile_v), f32 accumulation on the MXU.
    logits = lax.dot_general(xn, e_ref[...], (((1,), (1,)), ((), ())),
                             preferred_element_type=jnp.float32) * logit_scale

    col = lax.broadcasted_iota(jnp.int32, logits.shape, 1) + j * tile_v
    flag = mask_ref[0].astype(jnp.float32)          # 1.0 while end token is forbidden
    logits = logits + jnp.where(col == end_id, jnp.float32(-1e9), jnp.float32(0.0)) * flag

    tile_max = jnp.max(logits, axis=-1, keepdims=True)                      # (B, 1)
    tile_arg = jnp.min(jnp.where(logits >= tile_max, col, jnp.int32(2 ** 30)),
                       axis=-1, keepdims=True)                              # (B, 1)
    m_old = m_sc[...]
    m_new = jnp.maximum(m_old, tile_max)
    s_sc[...] = s_sc[...] * jnp.exp(m_old - m_new) + \
        jnp.sum(jnp.exp(logits - m_new), axis=-1, keepdims=True)
    idx_sc[...] = jnp.where(tile_max > m_old, tile_arg, idx_sc[...])
    m_sc[...] = m_new

    @pl.when(j == pl.num_programs(0) - 1)
    def _finalize():
        ids_ref[...] = idx_sc[...]
        lp_ref[...] = -jnp.log(s_sc[...])           # log-softmax value of the argmax token


def pallas_lmhead_greedy(hidden, ln_w, emb, mask_end, *, logit_scale, end_id, eps=1e-6):
    """hidden: (B, D) f32, ln_w: (D,) f32, emb: (V, D) bf16, mask_end: (1,) int32."""
    B, D = hidden.shape
    V = emb.shape[0]
    tv = _pick_n_tile(V, D)
    grid_spec = pltpu.PrefetchScalarGridSpec(
        num_scalar_prefetch=1,
        grid=(V // tv,),
        in_specs=[pl.BlockSpec((B, D), lambda j, m: (0, 0)),
                  pl.BlockSpec((1, D), lambda j, m: (0, 0)),
                  pl.BlockSpec((tv, D), lambda j, m: (j, 0))],
        out_specs=(pl.BlockSpec((B, 1), lambda j, m: (0, 0)),
                   pl.BlockSpec((B, 1), lambda j, m: (0, 0))),
        scratch_shapes=[pltpu.VMEM((B, 1), jnp.float32),   # running max
                        pltpu.VMEM((B, 1), jnp.float32),   # running sum of exp
                        pltpu.VMEM((B, 1), jnp.int32)])    # running argmax
    ids, lp = pl.pallas_call(
        functools.partial(_lmhead_greedy_kernel, eps=eps, logit_scale=logit_scale,
                          end_id=end_id, tile_v=tv),
        grid_spec=grid_spec,
        out_shape=(jax.ShapeDtypeStruct((B, 1), jnp.int32),
                   jax.ShapeDtypeStruct((B, 1), jnp.float32)),
        compiler_params=pltpu.CompilerParams(dimension_semantics=("arbitrary",)),
    )(mask_end, hidden, ln_w.reshape(1, D), emb)
    return ids[:, 0], lp[:, 0]


# --------------------------- T5 helper (glue) ------------------------------ #

def _relative_position_bucket(relative_position, num_buckets, max_distance):
    # decoder self-attention: bidirectional=False
    rp = -jnp.minimum(relative_position, 0)
    max_exact = num_buckets // 2
    is_small = rp < max_exact
    rp_f = jnp.maximum(rp.astype(jnp.float32), 1.0)
    val_if_large = max_exact + (
        jnp.log(rp_f / max_exact) / math.log(max_distance / max_exact)
        * (num_buckets - max_exact)
    ).astype(jnp.int32)
    val_if_large = jnp.minimum(val_if_large, num_buckets - 1)
    return jnp.where(is_small, rp, val_if_large)


# ------------------------------ Module port -------------------------------- #

class FTT5Decoding:
    """JAX/Pallas re-implementation of FasterTransformer T5Decoding (greedy)."""

    def __init__(self, head_num, head_size, inter_size, mem_d_model, d_model,
                 num_layer, start_id, end_id, vocab_size, q_scaling=1.0,
                 num_bucket=32, max_distance=128, tie_word_embeddings=True,
                 activation_type='relu', seed=0):
        assert activation_type == 'relu'  # TODO(synk): gated-gelu / other activations
        self.head_num, self.head_size, self.inter_size = head_num, head_size, inter_size
        self.mem_d_model, self.d_model, self.num_layer = mem_d_model, d_model, num_layer
        self.start_id, self.end_id, self.vocab_size = start_id, end_id, vocab_size
        self.q_scaling, self.num_bucket, self.max_distance = q_scaling, num_bucket, max_distance
        self.tie_word_embeddings = tie_word_embeddings

        H, dh, D, I = head_num, head_size, d_model, inter_size
        key = jax.random.PRNGKey(seed)
        n_mats = 8
        keys = jax.random.split(key, num_layer * n_mats + 2)

        def nrm(k, shape):
            # weights kept in bf16: halves HBM streaming per decode step, full-rate MXU
            return (0.02 * jax.random.normal(k, shape, jnp.float32)).astype(jnp.bfloat16)

        layers = []
        ki = 0
        for _ in range(num_layer):
            layers.append(dict(
                ln_self=jnp.ones((D,), jnp.float32),
                w_qkv=nrm(keys[ki + 0], (D, 3 * H * dh)),     # packed wq|wk|wv
                wo=nrm(keys[ki + 1], (H * dh, D)),
                ln_cross=jnp.ones((D,), jnp.float32),
                cq=nrm(keys[ki + 2], (D, H * dh)),
                ck=nrm(keys[ki + 3], (mem_d_model, H * dh)),
                cv=nrm(keys[ki + 4], (mem_d_model, H * dh)),
                co=nrm(keys[ki + 5], (H * dh, D)),
                ln_ffn=jnp.ones((D,), jnp.float32),
                wi=nrm(keys[ki + 6], (D, I)),
                wo_ffn=nrm(keys[ki + 7], (I, D)),
            ))
            ki += n_mats
        self.params = dict(
            layers=layers,
            embedding=nrm(keys[ki], (vocab_size, D)),          # (V, D) bf16, never transposed
            rel_bias=(0.02 * jax.random.normal(keys[ki + 1], (num_bucket, H), jnp.float32)),
            final_ln=jnp.ones((D,), jnp.float32),
        )

    def forward(self, beam_width, max_seq_len, top_k, top_p,
                beam_search_diversity_rate, temperature, len_penalty,
                repetition_penalty, presence_penalty, min_length, random_seed,
                mem_hidden_states, mem_seq_len,
                is_return_output_log_probs, is_return_cum_log_probs,
                is_return_cross_attentions=False,
                bad_words_list=None, stop_words_list=None):
        assert beam_width == 1          # TODO(synk): beam search not implemented
        assert not is_return_cross_attentions  # TODO(synk): cross-attention return not implemented
        assert bad_words_list is None and stop_words_list is None  # TODO(synk): word lists
        # TODO(synk): top_k>1/top_p sampling, len/repetition/presence penalties,
        #             beam_search_diversity_rate and random_seed are ignored (pure greedy).

        p = self.params
        B, mem_T, mem_d = mem_hidden_states.shape
        H, dh, D = self.head_num, self.head_size, self.d_model
        L, S, V = self.num_layer, int(max_seq_len), self.vocab_size
        scale = 1.0 / (math.sqrt(dh) * self.q_scaling)
        logit_scale = ((D ** -0.5) if self.tie_word_embeddings else 1.0) / float(temperature)

        mem = mem_hidden_states.astype(jnp.float32)
        mem_seq_len = jnp.asarray(mem_seq_len, jnp.int32)

        # Precompute cross-attention K/V (bf16) from encoder memory, per layer (one time).
        mem_flat = mem.reshape(B * mem_T, mem_d)
        ck_list, cv_list = [], []
        for l in range(L):
            lw = p['layers'][l]
            ck = pallas_matmul(mem_flat, lw['ck']).reshape(B, mem_T, H, dh).transpose(0, 2, 1, 3)
            cv = pallas_matmul(mem_flat, lw['cv']).reshape(B, mem_T, H, dh).transpose(0, 2, 1, 3)
            ck_list.append(ck)
            cv_list.append(cv)
        cross_k = jnp.stack(ck_list)     # (L, B, H, mem_T, dh) bf16
        cross_v = jnp.stack(cv_list)

        # TODO(synk): if a mem_seq_len entry is 0 the fully-masked softmax row degenerates
        #             to uniform-over-padding (same as the previous version).
        mem_pos = jnp.arange(mem_T, dtype=jnp.int32)
        cross_bias = jnp.where(mem_pos[None, :] < mem_seq_len[:, None], 0.0, -1e9)
        cross_bias = jnp.broadcast_to(cross_bias[:, None, :].astype(jnp.float32), (B, H, mem_T))

        emb = p['embedding']
        key_pos = jnp.arange(S, dtype=jnp.int32)
        HD = H * dh

        def body(step, carry):
            cur_ids, sk, sv, out_ids, out_lp, cum_lp, finished, seq_len = carry
            hidden = jnp.take(emb, cur_ids, axis=0).astype(jnp.float32)      # (B, D) f32

            # self-attention bias: shared relative-position bias + causal mask (f32)
            bucket = _relative_position_bucket(key_pos - step, self.num_bucket, self.max_distance)
            rel_bias = jnp.take(p['rel_bias'], bucket, axis=0).T              # (H, S)
            causal = jnp.where(key_pos <= step, 0.0, -1e9).astype(jnp.float32)
            self_bias = jnp.broadcast_to((rel_bias + causal[None, :])[None], (B, H, S))

            for l in range(L):
                lw = p['layers'][l]
                # self-attention (fused RMSNorm + packed QKV projection)
                qkv = pallas_rms_matmul(hidden, lw['ln_self'], lw['w_qkv'])   # (B, 3*HD) bf16
                q = qkv[:, :HD].reshape(B, H, dh)
                knew = qkv[:, HD:2 * HD].reshape(B, H, dh)
                vnew = qkv[:, 2 * HD:].reshape(B, H, dh)
                # TODO(synk): write K/V into the cache from inside a Pallas kernel via
                #             input_output_aliases to guarantee in-place updates.
                sk = sk.at[l, :, :, step, :].set(knew)
                sv = sv.at[l, :, :, step, :].set(vnew)
                ctx = pallas_attention(q, sk[l], sv[l], self_bias, scale)     # (B, D) bf16
                hidden = pallas_matmul_residual(ctx, lw['wo'], hidden)        # (B, D) f32

                # cross-attention
                cq = pallas_rms_matmul(hidden, lw['ln_cross'], lw['cq']).reshape(B, H, dh)
                ctx = pallas_attention(cq, cross_k[l], cross_v[l], cross_bias, scale)
                hidden = pallas_matmul_residual(ctx, lw['co'], hidden)

                # feed-forward (relu), fused norm + up-proj, fused down-proj + residual
                inter = pallas_rms_matmul(hidden, lw['ln_ffn'], lw['wi'], relu=True)
                hidden = pallas_matmul_residual(inter, lw['wo_ffn'], hidden)

            # fused final RMSNorm + tied LM head (tiled over vocab) + greedy argmax/log-prob
            mask_end = (step < min_length).astype(jnp.int32).reshape(1)
            ids, lp = pallas_lmhead_greedy(hidden, p['final_ln'], emb, mask_end,
                                           logit_scale=logit_scale, end_id=self.end_id)

            next_ids = jnp.where(finished, jnp.int32(self.end_id), ids)
            step_lp = jnp.where(finished, jnp.float32(0.0), lp)
            out_ids = out_ids.at[:, step].set(next_ids)
            out_lp = out_lp.at[:, step].set(step_lp)
            cum_lp = cum_lp + step_lp
            seq_len = jnp.where(finished, seq_len, step + 1)
            finished = finished | (ids == self.end_id)
            return (next_ids, sk, sv, out_ids, out_lp, cum_lp, finished, seq_len)

        init = (
            jnp.full((B,), self.start_id, jnp.int32),
            jnp.zeros((L, B, H, S, dh), jnp.bfloat16),      # self-attn K cache (bf16)
            jnp.zeros((L, B, H, S, dh), jnp.bfloat16),      # self-attn V cache (bf16)
            jnp.zeros((B, S), jnp.int32),
            jnp.zeros((B, S), jnp.float32),
            jnp.zeros((B,), jnp.float32),
            jnp.zeros((B,), bool),
            jnp.zeros((B,), jnp.int32),
        )
        carry = lax.fori_loop(0, S, body, init)
        _, _, _, out_ids, out_lp, cum_lp, _, seq_len = carry

        results = [out_ids.reshape(B, 1, S), seq_len.reshape(B, 1)]
        if is_return_output_log_probs:
            results.append(out_lp.reshape(B, 1, S))
        if is_return_cum_log_probs:
            results.append(cum_lp.reshape(B, 1))
        return results


# ------------------------------- demo main ---------------------------------- #

if __name__ == "__main__":
    B, mem_T = 2, 8
    head_num, head_size = 4, 8
    d_model = head_num * head_size            # 32
    inter_size, mem_d_model = 64, 32
    num_layer, vocab_size = 2, 64
    start_id, end_id = 0, 1
    max_seq_len = 8

    model = FTT5Decoding(head_num, head_size, inter_size, mem_d_model, d_model,
                         num_layer, start_id, end_id, vocab_size,
                         q_scaling=1.0, num_bucket=32, max_distance=128,
                         tie_word_embeddings=True, activation_type='relu', seed=0)

    key = jax.random.PRNGKey(0)
    mem_hidden_states = jax.random.normal(key, (B, mem_T, mem_d_model), jnp.float32)
    mem_seq_len = jnp.array([mem_T, mem_T - 2], jnp.int32)

    results = model.forward(
        beam_width=1, max_seq_len=max_seq_len, top_k=1, top_p=0.0,
        beam_search_diversity_rate=0.0, temperature=1.0, len_penalty=0.0,
        repetition_penalty=1.0, presence_penalty=0.0, min_length=1,
        random_seed=0, mem_hidden_states=mem_hidden_states,
        mem_seq_len=mem_seq_len,
        is_return_output_log_probs=True, is_return_cum_log_probs=True)

    results = [jax.block_until_ready(r) for r in results]
    output_ids, sequence_length, output_log_probs, cum_log_probs = results
    assert output_ids.shape == (B, 1, max_seq_len) and output_ids.dtype == jnp.int32
    assert sequence_length.shape == (B, 1)
    assert output_log_probs.shape == (B, 1, max_seq_len)
    assert cum_log_probs.shape == (B, 1)
    assert bool(jnp.all(jnp.isfinite(output_log_probs)))
    assert bool(jnp.all(output_log_probs <= 0.0))
    print("KERNEL_OK")
</pallas_src>

<mosaic_0001>
module attributes {stable_mosaic.version = 11 : i64} {
  func.func @_matmul_kernel(%arg0: i32, %arg1: memref<16x32xf32, #tpu.memory_space<vmem>>, %arg2: memref<32x32xbf16, #tpu.memory_space<vmem>>, %arg3: memref<16x32xbf16, #tpu.memory_space<vmem>>) attributes {dimension_semantics = [#tpu.dimension_semantics<parallel>], iteration_bounds = array<i64: 1>, scalar_prefetch = 0 : i64, scratch_operands = 0 : i64, tpu.core_type = #tpu.core_type<tc>, window_params = [{pipeline_mode = #tpu.pipeline_mode<synchronous>, transform_indices = @transform_0, window_bounds = array<i64: 16, 32>}, {transform_indices = @transform_1, window_bounds = array<i64: 32, 32>}, {transform_indices = @transform_2, window_bounds = array<i64: 16, 32>}]} {
    %c0 = arith.constant 0 : index
    %c0_0 = arith.constant 0 : index
    %0 = vector.load %arg1[%c0, %c0_0] : memref<16x32xf32, #tpu.memory_space<vmem>>, vector<16x32xf32>
    %1 = arith.truncf %0 : vector<16x32xf32> to vector<16x32xbf16>
    %c0_1 = arith.constant 0 : index
    %c0_2 = arith.constant 0 : index
    %2 = vector.load %arg2[%c0_1, %c0_2] : memref<32x32xbf16, #tpu.memory_space<vmem>>, vector<32x32xbf16>
    %cst = arith.constant dense<0.000000e+00> : vector<16x32xf32>
    %3 = tpu.matmul %1, %2, %cst {dimension_numbers = #tpu.dot_dimension_numbers<[1], [0], [0], [1], [0, 0, 1, 1], [], []>} : vector<16x32xbf16>, vector<32x32xbf16>, vector<16x32xf32> -> vector<16x32xf32>
    %4 = arith.truncf %3 : vector<16x32xf32> to vector<16x32xbf16>
    %c0_3 = arith.constant 0 : index
    %c0_4 = arith.constant 0 : index
    %5 = vector.load %arg3[%c0_3, %c0_4] : memref<16x32xbf16, #tpu.memory_space<vmem>>, vector<16x32xbf16>
    tpu.vector_store %arg3[%c0_3, %c0_4], %4 {strides = array<i32>} : memref<16x32xbf16, #tpu.memory_space<vmem>>, vector<16x32xbf16>,
    return
  }
  func.func @transform_0(%arg0: i32) -> (i32, i32) {
    %c0_i32 = arith.constant 0 : i32
    %c0_i32_0 = arith.constant 0 : i32
    %c0_i32_1 = arith.constant 0 : i32
    return %c0_i32, %c0_i32_0 : i32, i32
  }
  func.func @transform_1(%arg0: i32) -> (i32, i32) {
    %c0_i32 = arith.constant 0 : i32
    %c0_i32_0 = arith.constant 0 : i32
    return %c0_i32, %arg0 : i32, i32
  }
  func.func @transform_2(%arg0: i32) -> (i32, i32) {
    %c0_i32 = arith.constant 0 : i32
    %c0_i32_0 = arith.constant 0 : i32
    return %c0_i32, %arg0 : i32, i32
  }
}

</mosaic_0001>

<llo_original>
// kernel: tpu_custom_call.1
$region0: #{tpu_custom_call.1}
  #allocation0 [shape = 'u32[]', space=smem, size = 0x4, offset = 0x4, fixed_abs, tag = 'smem constant byte address 0x4 - core index']
  #allocation1 [shape = 'u32[144,128]{1,0:T(1,128)}', space=vmem, size = 0x12000, scoped, tag = 'internal scratch']
  %s0 = inlined_call_operand.hbm [shape: f32[16,32], index: 0, kind: input, shape index: {}]
  %s1 = inlined_call_operand.hbm [shape: bf16[32,32], index: 1, kind: input, shape index: {}]
  %s2 = inlined_call_operand.hbm [shape: bf16[16,32], index: 2, kind: output, shape index: {}]
  %s3 = sld [smem:[#allocation0]]
  $region26: #{tpu_custom_call.1} parent=0
    _
  %s5 = ssub.s32 1, %s3
  %s6 = scalar_select 0, %s5, %s3
  $region1: #{tpu_custom_call.1} parent=0
    #allocation2 [shape = 'u8[8192]{0}', space=vmem, size = 0x2000, scoped, tag = 'input window, operand 0, single buffered']
    #allocation3 [shape = 's32[1]{0}', space=sflag, size = 0x4, scoped, tag = 'scoped memory for tpu_custom_call.1']
    #allocation4 [shape = 's32[1]{0}', space=sflag, size = 0x4, scoped, tag = 'scoped memory for tpu_custom_call.1']
    #allocation5 [shape = 'u8[8192]{0}', space=vmem, size = 0x2000, scoped, tag = 'input window, operand 1, single buffered']
    #allocation6 [shape = 's32[1]{0}', space=sflag, size = 0x4, scoped, tag = 'scoped memory for tpu_custom_call.1']
    #allocation7 [shape = 'u8[4096]{0}', space=vmem, size = 0x1000, scoped, tag = 'output window, operand 0, single buffered']
    %7 = vsyncpa [#allocation3], 0
    %8 = vsyncpa [#allocation6], 0
    %9 = vsyncpa [#allocation4], 0
    // Predicated region
    $region2: #{tpu_custom_call.1} parent=1 // pred_check
      _
    $region3: #{tpu_custom_call.1} parent=1 // pred_check_branch
      %11 = sbr.rel (0) target = $region5
    $region4: #{tpu_custom_call.1} parent=1 // pred_region
      %s13 = ssub.s32 256, 256
      %14 = vsyncadd [#allocation3], %s13
      %s15 = sshll.u32 [#allocation2], 4
      %s16 = int_to_ptr.vmem [resolvable:$true] %s15
      %21 = dma.hbm_to_vmem [thread:$0]  %s0, 256, %s16, [#allocation3], 128, 128, 8
    $region5: #{tpu_custom_call.1} parent=1 // pred_fallthru
      _
    // Predicated region
    $region6: #{tpu_custom_call.1} parent=1 // pred_check
      _
    $region7: #{tpu_custom_call.1} parent=1 // pred_check_branch
      %23 = sbr.rel (0) target = $region9
    $region8: #{tpu_custom_call.1} parent=1 // pred_region
      %s25 = ssub.s32 256, 256
      %26 = vsyncadd [#allocation6], %s25
      %s27 = sshll.u32 [#allocation5], 4
      %s28 = int_to_ptr.vmem [resolvable:$true] %s27
      %33 = dma.hbm_to_vmem [thread:$0]  %s1, 256, %s28, [#allocation6], 64, 64, 4
    $region9: #{tpu_custom_call.1} parent=1 // pred_fallthru
      _
    // Predicated region
    $region10: #{tpu_custom_call.1} parent=1 // pred_check
      _
    $region11: #{tpu_custom_call.1} parent=1 // pred_check_branch
      %35 = sbr.rel (0) target = $region13
    $region12: #{tpu_custom_call.1} parent=1 // pred_region
      %36 = dma.done [#allocation3], 256
    $region13: #{tpu_custom_call.1} parent=1 // pred_fallthru
      _
    // Predicated region
    $region14: #{tpu_custom_call.1} parent=1 // pred_check
      _
    $region15: #{tpu_custom_call.1} parent=1 // pred_check_branch
      %38 = sbr.rel (0) target = $region17
    $region16: #{tpu_custom_call.1} parent=1 // pred_region
      %39 = dma.done [#allocation6], 256
    $region17: #{tpu_custom_call.1} parent=1 // pred_fallthru
      _
    %v41 = vld [vmem:[#allocation2] sm:$0xff]
    %v42 = vld [vmem:[#allocation2 + $0x8] sm:$0xff]
    %v43 = vpack.c.bf16 %v42, %v41
    %v44 = vld [vmem:[#allocation5] sm:$0xf]
    %v45 = vld [vmem:[#allocation5 + $0x4] sm:$0xf]
    %v46 = vld [vmem:[#allocation5 + $0x8] sm:$0xf]
    %v47 = vld [vmem:[#allocation5 + $0xc] sm:$0xf]
    %v52 = vunpack.c.l.b16 %v44
    %v53 = vunpack.c.l.b16 %v45
    %v54 = vunpack.c.l.b16 %v46
    %v55 = vunpack.c.l.b16 %v47
    %v56 = vpack.c.b16 %v53, %v52
    %v57 = vpack.c.b16 %v55, %v54
    %vm60 = vcmask 261120
    %v62 = vsel %vm60, %v43, 0
    %64 = vmatprep.subr.bf16.mxu0 0
    %65 = vmatpush1.bf16.msra.mxu0 %v56
    %66 = vmatprep.subr.bf16.mxu0 0
    %67 = vmatpush1.bf16.msra.mxu0 %v57
    %68 = vmatprep.subr.bf16.mxu0 0
    %69 = vmatpush1.bf16.msra.mxu0 0
    %70 = vmatprep.subr.bf16.mxu0 0
    %71 = vmatpush1.bf16.msra.mxu0 0
    %72 = vmatprep.subr.bf16.mxu0 0
    %73 = vmatpush1.bf16.msra.mxu0 0
    %74 = vmatprep.subr.bf16.mxu0 0
    %75 = vmatpush1.bf16.msra.mxu0 0
    %76 = vmatprep.subr.bf16.mxu0 0
    %77 = vmatpush1.bf16.msra.mxu0 0
    %78 = vmatprep.subr.bf16.mxu0 0
    %79 = vmatpush1.bf16.msra.mxu0 0
    %80 = vmatprep.subr.bf16.mxu0 0
    %81 = vmatpush1.bf16.msra.mxu0 0
    %82 = vmatprep.subr.bf16.mxu0 0
    %83 = vmatpush1.bf16.msra.mxu0 0
    %84 = vmatprep.subr.bf16.mxu0 0
    %85 = vmatpush1.bf16.msra.mxu0 0
    %86 = vmatprep.subr.bf16.mxu0 0
    %87 = vmatpush1.bf16.msra.mxu0 0
    %88 = vmatprep.subr.bf16.mxu0 0
    %89 = vmatpush1.bf16.msra.mxu0 0
    %90 = vmatprep.subr.bf16.mxu0 0
    %91 = vmatpush1.bf16.msra.mxu0 0
    %92 = vmatprep.subr.bf16.mxu0 0
    %93 = vmatpush1.bf16.msra.mxu0 0
    %94 = vmatprep.subr.bf16.mxu0 0
    %95 = vmatpush1.bf16.msra.mxu0 0
    %96 = vmatprep.mubr.bf16.mxu0 0
    %97 = vmatmul.mubr.bf16.gmra.mrb[0].mxu0 %v62
    %v98 = vpop.f32.mrb[0].mxu0
    %v99 = vadd.f32 0.0, %v98
    %v100 = vpop.f32.mrb[0].mxu0
    %v101 = vpop.f32.mrb[0].mxu0
    %v102 = vadd.f32 0.0, %v101
    %v103 = vpop.f32.mrb[0].mxu0
    %104 = vdwg.mxu0
    %v105 = vpack.c.bf16 %v102, %v99
    %v107 = vunpack.c.l.b16 %v105
    %v108 = vunpack.c.h.b16 %v105
    %v109 = vpack.c.b16 %v107, %v107
    %v110 = vpack.c.b16 %v108, %v108
    %vm113 = vcmask 257024
    %114 = vst.msk [vmem:[#allocation7] sm:$0xf] %vm113, %v109
    %115 = vst.msk [vmem:[#allocation7 + $0x4] sm:$0xf] %vm113, %v110
    // Predicated region
    $region18: #{tpu_custom_call.1} parent=1 // pred_check
      _
    $region19: #{tpu_custom_call.1} parent=1 // pred_check_branch
      %117 = sbr.rel (0) target = $region21
    $region20: #{tpu_custom_call.1} parent=1 // pred_region
      %s119 = ssub.s32 128, 128
      %120 = vsyncadd [#allocation4], %s119
      %s121 = sshll.u32 [#allocation7], 4
      %s122 = int_to_ptr.vmem [resolvable:$true] %s121
      %127 = dma.vmem_to_hbm [thread:$0]  %s122, 128, %s2, [#allocation4], 64, 64, 4
    $region21: #{tpu_custom_call.1} parent=1 // pred_fallthru
      _
    // Predicated region
    $region22: #{tpu_custom_call.1} parent=1 // pred_check
      _
    $region23: #{tpu_custom_call.1} parent=1 // pred_check_branch
      %129 = sbr.rel (0) target = $region25
    $region24: #{tpu_custom_call.1} parent=1 // pred_region
      %130 = dma.done [#allocation4], 128
    $region25: #{tpu_custom_call.1} parent=1 // pred_fallthru
      _
    %131 = vsyncpa [#allocation3], 1
    %132 = vsyncpa [#allocation6], 1
    %133 = vsyncpa [#allocation4], 1

</llo_original>
